<compile_context>
chip_gen: v7x
topology: tpu7x:2x2x1
jax: 0.10.0
libtpu: 0.0.40
codegen_flags: <defaults>
</compile_context>

<pallas_src>
import functools

import jax
import jax.numpy as jnp
import numpy as np
from jax import lax
from jax.experimental import pallas as pl
from jax.experimental.pallas import tpu as pltpu


def _rnn_kernel(u_ref, noise_ref, r0_ref, w_in_t_ref, w_rec_t_ref, w_out_t_ref,
                hs_ref, o_ref, drive_ref, *, alpha, seq_len, unroll):
    """Sequential leaky-tanh RNN; entire problem is VMEM-resident."""
    r0 = r0_ref[...]                                   # (1, H)
    # x0 = arctanh(r0)  (matches the torch reference's x = arctanh(r))
    x = 0.5 * jnp.log((1.0 + r0) / (1.0 - r0))
    one_minus_alpha = 1.0 - alpha

    # Fold alpha into the recurrent weight ONCE (off the serial chain), so the
    # per-step update has no extra multiply on the critical path.
    w_rec_a = alpha * w_rec_t_ref[...]                 # (H, H)

    # Hoisted input projection for all T steps at once:
    #   drive[t] = alpha * (W_in @ u[t] + noise[t])    shape (T, H)
    drive = alpha * (
        jnp.dot(u_ref[...], w_in_t_ref[...], preferred_element_type=jnp.float32)
        + noise_ref[...])

    # Row 0 of the hidden-state history is the initial state.
    hs_ref[pl.ds(0, 1), :] = r0

    if unroll:
        # Statically unrolled recurrence (small compile-time T): gives the
        # scheduler cross-iteration visibility; rows kept in vregs.
        r = r0
        rows = []
        for t in range(seq_len):
            pre = jnp.dot(r, w_rec_a, preferred_element_type=jnp.float32)  # (1, H)
            x = one_minus_alpha * x + pre + drive[t:t + 1, :]
            r = jnp.tanh(x)                            # noise_con == 0
            rows.append(r)

        hs_body = jnp.concatenate(rows, axis=0)        # (T, H), needed for o anyway
        hs_ref[pl.ds(1, seq_len), :] = hs_body
        # Hoisted output projection: one (T, H) @ (H, D_out) matmul.
        o_ref[...] = jnp.dot(hs_body, w_out_t_ref[...],
                             preferred_element_type=jnp.float32)
    else:
        # Long-sequence path: fori_loop with bounded live ranges; drive lives
        # in a VMEM scratch so per-step reads are cheap dynamic-row loads.
        drive_ref[...] = drive

        def body(t, carry):
            x_c, r_c = carry
            pre = jnp.dot(r_c, w_rec_a, preferred_element_type=jnp.float32)
            x_n = one_minus_alpha * x_c + pre + drive_ref[pl.ds(t, 1), :]
            r_n = jnp.tanh(x_n)
            hs_ref[pl.ds(t + 1, 1), :] = r_n
            return (x_n, r_n)

        _ = lax.fori_loop(0, seq_len, body, (x, r0))

        # Hoisted output projection after the loop (read-back from VMEM).
        hs = hs_ref[...]                               # (T+1, H)
        o_ref[...] = jnp.dot(hs[1:, :], w_out_t_ref[...],
                             preferred_element_type=jnp.float32)


@functools.partial(jax.jit, static_argnames=("alpha",))
def rnn_forward(u, r, w_in, w_rec, w_out, noise, *, alpha=0.1):
    """Returns (hidden_states [T+1, H], o [T, D_out]) matching the torch module."""
    T = int(u.shape[0])
    H = int(r.shape[0])
    D_out = int(w_out.shape[0])

    r0 = r.reshape(1, H).astype(jnp.float32)
    u = u.astype(jnp.float32)
    noise = noise.astype(jnp.float32)
    w_in_t = jnp.transpose(w_in).astype(jnp.float32)     # (D_in, H)
    w_rec_t = jnp.transpose(w_rec).astype(jnp.float32)   # (H, H)
    w_out_t = jnp.transpose(w_out).astype(jnp.float32)   # (H, D_out)

    unroll = T <= 32   # small T: static unroll; large T: fori_loop path

    vmem = pl.BlockSpec(memory_space=pltpu.MemorySpace.VMEM)
    hidden_states, o = pl.pallas_call(
        functools.partial(_rnn_kernel, alpha=float(alpha), seq_len=T,
                          unroll=unroll),
        out_shape=(jax.ShapeDtypeStruct((T + 1, H), jnp.float32),
                   jax.ShapeDtypeStruct((T, D_out), jnp.float32)),
        in_specs=[vmem] * 6,
        out_specs=(vmem, vmem),
        scratch_shapes=[pltpu.VMEM((T, H), jnp.float32)],   # drive scratch
    )(u, noise, r0, w_in_t, w_rec_t, w_out_t)
    return hidden_states, o


def _xavier_uniform(key, shape):
    fan_out, fan_in = shape
    bound = (6.0 / (fan_in + fan_out)) ** 0.5
    return jax.random.uniform(key, shape, jnp.float32, -bound, bound)


if __name__ == "__main__":
    # Small shapes consistent with the module's forward.
    D_IN = 4         # input_dims
    H = 32           # hidden_dims
    D_OUT = 2        # output_dims
    ALPHA = 0.1
    NOISE_IN = 0.1   # std of the in-loop input noise (torch.normal(zeros, noise_in))

    key = jax.random.PRNGKey(0)
    k_win, k_wrec, k_wout, key = jax.random.split(key, 4)

    # Deterministic parameter init (xavier_uniform, zeroed W_rec diagonal).
    w_in = _xavier_uniform(k_win, (H, D_IN))
    w_rec = _xavier_uniform(k_wrec, (H, H)) * (1.0 - jnp.eye(H, dtype=jnp.float32))
    w_out = _xavier_uniform(k_wout, (D_OUT, H))

    w_in_np = np.asarray(w_in, np.float32)
    w_rec_np = np.asarray(w_rec, np.float32)
    w_out_np = np.asarray(w_out, np.float32)

    def ref_forward_np(u, r, noise, alpha):
        """Pure-numpy reference implementing the torch loop exactly."""
        u = np.asarray(u, np.float32)
        r = np.asarray(r, np.float32)
        noise = np.asarray(noise, np.float32)
        T = u.shape[0]
        x = np.arctanh(r)
        hs = [r]
        os_ = []
        for t in range(T):
            x = (1.0 - alpha) * x + alpha * (w_rec_np @ r + w_in_np @ u[t] + noise[t])
            r = np.tanh(x)
            hs.append(r)
            os_.append(w_out_np @ r)
        return np.stack(hs, axis=0), np.stack(os_, axis=0)

    # Exercise both the statically-unrolled path (T=8) and the fori_loop
    # long-sequence path (T=96).
    for T in (8, 96):
        k_u, k_r, k_n, key = jax.random.split(key, 4)
        u = jax.random.normal(k_u, (T, D_IN), jnp.float32)
        # r must lie strictly inside (-1, 1) so arctanh is finite.
        r = 0.5 * jnp.tanh(jax.random.normal(k_r, (H,), jnp.float32))
        noise = NOISE_IN * jax.random.normal(k_n, (T, H), jnp.float32)

        hidden_states, o = rnn_forward(u, r, w_in, w_rec, w_out, noise, alpha=ALPHA)
        jax.block_until_ready((hidden_states, o))

        hs_ref_val, o_ref_val = ref_forward_np(u, r, noise, ALPHA)

        hs_np = np.asarray(hidden_states)
        o_np = np.asarray(o)
        assert hs_np.shape == (T + 1, H)
        assert o_np.shape == (T, D_OUT)
        assert np.all(np.isfinite(hs_np)) and np.all(np.isfinite(o_np))
        assert np.allclose(hs_np, hs_ref_val, atol=1e-4, rtol=1e-4)
        assert np.allclose(o_np, o_ref_val, atol=1e-4, rtol=1e-4)

    print("KERNEL_OK")
</pallas_src>

<mosaic_0001>
module attributes {stable_mosaic.version = 11 : i64} {
  func.func @_rnn_kernel(%arg0: memref<8x4xf32, #tpu.memory_space<vmem>>, %arg1: memref<8x32xf32, #tpu.memory_space<vmem>>, %arg2: memref<1x32xf32, #tpu.memory_space<vmem>>, %arg3: memref<4x32xf32, #tpu.memory_space<vmem>>, %arg4: memref<32x32xf32, #tpu.memory_space<vmem>>, %arg5: memref<32x2xf32, #tpu.memory_space<vmem>>, %arg6: memref<9x32xf32, #tpu.memory_space<vmem>>, %arg7: memref<8x2xf32, #tpu.memory_space<vmem>>, %arg8: memref<8x32xf32, #tpu.memory_space<vmem>>) attributes {dimension_semantics = [], scalar_prefetch = 0 : i64, scratch_operands = 1 : i64, tpu.core_type = #tpu.core_type<tc>} {
    %c0 = arith.constant 0 : index
    %c0_0 = arith.constant 0 : index
    %0 = vector.load %arg2[%c0, %c0_0] : memref<1x32xf32, #tpu.memory_space<vmem>>, vector<1x32xf32>
    %cst = arith.constant 1.000000e+00 : f32
    %1 = vector.broadcast %cst : f32 to vector<1x32xf32>
    %2 = arith.addf %1, %0 : vector<1x32xf32>
    %cst_1 = arith.constant 1.000000e+00 : f32
    %3 = vector.broadcast %cst_1 : f32 to vector<1x32xf32>
    %4 = arith.subf %3, %0 : vector<1x32xf32>
    %5 = arith.divf %2, %4 : vector<1x32xf32>
    %6 = math.log %5 : vector<1x32xf32>
    %cst_2 = arith.constant 5.000000e-01 : f32
    %7 = vector.broadcast %cst_2 : f32 to vector<1x32xf32>
    %8 = arith.mulf %7, %6 : vector<1x32xf32>
    %c0_3 = arith.constant 0 : index
    %c0_4 = arith.constant 0 : index
    %9 = vector.load %arg4[%c0_3, %c0_4] : memref<32x32xf32, #tpu.memory_space<vmem>>, vector<32x32xf32>
    %cst_5 = arith.constant 1.000000e-01 : f32
    %10 = vector.broadcast %cst_5 : f32 to vector<32x32xf32>
    %11 = arith.mulf %10, %9 : vector<32x32xf32>
    %c0_6 = arith.constant 0 : index
    %c0_7 = arith.constant 0 : index
    %12 = vector.load %arg0[%c0_6, %c0_7] : memref<8x4xf32, #tpu.memory_space<vmem>>, vector<8x4xf32>
    %c0_8 = arith.constant 0 : index
    %c0_9 = arith.constant 0 : index
    %13 = vector.load %arg3[%c0_8, %c0_9] : memref<4x32xf32, #tpu.memory_space<vmem>>, vector<4x32xf32>
    %cst_10 = arith.constant dense<0.000000e+00> : vector<8x32xf32>
    %14 = tpu.matmul %12, %13, %cst_10 {dimension_numbers = #tpu.dot_dimension_numbers<[1], [0], [0], [1], [0, 0, 1, 1], [], []>} : vector<8x4xf32>, vector<4x32xf32>, vector<8x32xf32> -> vector<8x32xf32>
    %c0_11 = arith.constant 0 : index
    %c0_12 = arith.constant 0 : index
    %15 = vector.load %arg1[%c0_11, %c0_12] : memref<8x32xf32, #tpu.memory_space<vmem>>, vector<8x32xf32>
    %16 = arith.addf %14, %15 : vector<8x32xf32>
    %cst_13 = arith.constant 1.000000e-01 : f32
    %17 = vector.broadcast %cst_13 : f32 to vector<8x32xf32>
    %18 = arith.mulf %17, %16 : vector<8x32xf32>
    %c0_14 = arith.constant 0 : index
    %c0_15 = arith.constant 0 : index
    %19 = vector.load %arg6[%c0_14, %c0_15] : memref<9x32xf32, #tpu.memory_space<vmem>>, vector<1x32xf32>
    tpu.vector_store %arg6[%c0_14, %c0_15], %0 {strides = array<i32>} : memref<9x32xf32, #tpu.memory_space<vmem>>, vector<1x32xf32>,
    %cst_16 = arith.constant dense<0.000000e+00> : vector<1x32xf32>
    %20 = tpu.matmul %0, %11, %cst_16 {dimension_numbers = #tpu.dot_dimension_numbers<[1], [0], [0], [1], [0, 0, 1, 1], [], []>} : vector<1x32xf32>, vector<32x32xf32>, vector<1x32xf32> -> vector<1x32xf32>
    %cst_17 = arith.constant 0.899999976 : f32
    %21 = vector.broadcast %cst_17 : f32 to vector<1x32xf32>
    %22 = arith.mulf %21, %8 : vector<1x32xf32>
    %23 = arith.addf %22, %20 : vector<1x32xf32>
    %24 = vector.extract_strided_slice %18 {offsets = [0, 0], sizes = [1, 32], strides = [1, 1]} : vector<8x32xf32> to vector<1x32xf32>
    %25 = arith.addf %23, %24 : vector<1x32xf32>
    %26 = math.tanh %25 : vector<1x32xf32>
    %cst_18 = arith.constant dense<0.000000e+00> : vector<1x32xf32>
    %27 = tpu.matmul %26, %11, %cst_18 {dimension_numbers = #tpu.dot_dimension_numbers<[1], [0], [0], [1], [0, 0, 1, 1], [], []>} : vector<1x32xf32>, vector<32x32xf32>, vector<1x32xf32> -> vector<1x32xf32>
    %cst_19 = arith.constant 0.899999976 : f32
    %28 = vector.broadcast %cst_19 : f32 to vector<1x32xf32>
    %29 = arith.mulf %28, %25 : vector<1x32xf32>
    %30 = arith.addf %29, %27 : vector<1x32xf32>
    %31 = vector.extract_strided_slice %18 {offsets = [1, 0], sizes = [1, 32], strides = [1, 1]} : vector<8x32xf32> to vector<1x32xf32>
    %32 = arith.addf %30, %31 : vector<1x32xf32>
    %33 = math.tanh %32 : vector<1x32xf32>
    %cst_20 = arith.constant dense<0.000000e+00> : vector<1x32xf32>
    %34 = tpu.matmul %33, %11, %cst_20 {dimension_numbers = #tpu.dot_dimension_numbers<[1], [0], [0], [1], [0, 0, 1, 1], [], []>} : vector<1x32xf32>, vector<32x32xf32>, vector<1x32xf32> -> vector<1x32xf32>
    %cst_21 = arith.constant 0.899999976 : f32
    %35 = vector.broadcast %cst_21 : f32 to vector<1x32xf32>
    %36 = arith.mulf %35, %32 : vector<1x32xf32>
    %37 = arith.addf %36, %34 : vector<1x32xf32>
    %38 = vector.extract_strided_slice %18 {offsets = [2, 0], sizes = [1, 32], strides = [1, 1]} : vector<8x32xf32> to vector<1x32xf32>
    %39 = arith.addf %37, %38 : vector<1x32xf32>
    %40 = math.tanh %39 : vector<1x32xf32>
    %cst_22 = arith.constant dense<0.000000e+00> : vector<1x32xf32>
    %41 = tpu.matmul %40, %11, %cst_22 {dimension_numbers = #tpu.dot_dimension_numbers<[1], [0], [0], [1], [0, 0, 1, 1], [], []>} : vector<1x32xf32>, vector<32x32xf32>, vector<1x32xf32> -> vector<1x32xf32>
    %cst_23 = arith.constant 0.899999976 : f32
    %42 = vector.broadcast %cst_23 : f32 to vector<1x32xf32>
    %43 = arith.mulf %42, %39 : vector<1x32xf32>
    %44 = arith.addf %43, %41 : vector<1x32xf32>
    %45 = vector.extract_strided_slice %18 {offsets = [3, 0], sizes = [1, 32], strides = [1, 1]} : vector<8x32xf32> to vector<1x32xf32>
    %46 = arith.addf %44, %45 : vector<1x32xf32>
    %47 = math.tanh %46 : vector<1x32xf32>
    %cst_24 = arith.constant dense<0.000000e+00> : vector<1x32xf32>
    %48 = tpu.matmul %47, %11, %cst_24 {dimension_numbers = #tpu.dot_dimension_numbers<[1], [0], [0], [1], [0, 0, 1, 1], [], []>} : vector<1x32xf32>, vector<32x32xf32>, vector<1x32xf32> -> vector<1x32xf32>
    %cst_25 = arith.constant 0.899999976 : f32
    %49 = vector.broadcast %cst_25 : f32 to vector<1x32xf32>
    %50 = arith.mulf %49, %46 : vector<1x32xf32>
    %51 = arith.addf %50, %48 : vector<1x32xf32>
    %52 = vector.extract_strided_slice %18 {offsets = [4, 0], sizes = [1, 32], strides = [1, 1]} : vector<8x32xf32> to vector<1x32xf32>
    %53 = arith.addf %51, %52 : vector<1x32xf32>
    %54 = math.tanh %53 : vector<1x32xf32>
    %cst_26 = arith.constant dense<0.000000e+00> : vector<1x32xf32>
    %55 = tpu.matmul %54, %11, %cst_26 {dimension_numbers = #tpu.dot_dimension_numbers<[1], [0], [0], [1], [0, 0, 1, 1], [], []>} : vector<1x32xf32>, vector<32x32xf32>, vector<1x32xf32> -> vector<1x32xf32>
    %cst_27 = arith.constant 0.899999976 : f32
    %56 = vector.broadcast %cst_27 : f32 to vector<1x32xf32>
    %57 = arith.mulf %56, %53 : vector<1x32xf32>
    %58 = arith.addf %57, %55 : vector<1x32xf32>
    %59 = vector.extract_strided_slice %18 {offsets = [5, 0], sizes = [1, 32], strides = [1, 1]} : vector<8x32xf32> to vector<1x32xf32>
    %60 = arith.addf %58, %59 : vector<1x32xf32>
    %61 = math.tanh %60 : vector<1x32xf32>
    %cst_28 = arith.constant dense<0.000000e+00> : vector<1x32xf32>
    %62 = tpu.matmul %61, %11, %cst_28 {dimension_numbers = #tpu.dot_dimension_numbers<[1], [0], [0], [1], [0, 0, 1, 1], [], []>} : vector<1x32xf32>, vector<32x32xf32>, vector<1x32xf32> -> vector<1x32xf32>
    %cst_29 = arith.constant 0.899999976 : f32
    %63 = vector.broadcast %cst_29 : f32 to vector<1x32xf32>
    %64 = arith.mulf %63, %60 : vector<1x32xf32>
    %65 = arith.addf %64, %62 : vector<1x32xf32>
    %66 = vector.extract_strided_slice %18 {offsets = [6, 0], sizes = [1, 32], strides = [1, 1]} : vector<8x32xf32> to vector<1x32xf32>
    %67 = arith.addf %65, %66 : vector<1x32xf32>
    %68 = math.tanh %67 : vector<1x32xf32>
    %cst_30 = arith.constant dense<0.000000e+00> : vector<1x32xf32>
    %69 = tpu.matmul %68, %11, %cst_30 {dimension_numbers = #tpu.dot_dimension_numbers<[1], [0], [0], [1], [0, 0, 1, 1], [], []>} : vector<1x32xf32>, vector<32x32xf32>, vector<1x32xf32> -> vector<1x32xf32>
    %cst_31 = arith.constant 0.899999976 : f32
    %70 = vector.broadcast %cst_31 : f32 to vector<1x32xf32>
    %71 = arith.mulf %70, %67 : vector<1x32xf32>
    %72 = arith.addf %71, %69 : vector<1x32xf32>
    %73 = vector.extract_strided_slice %18 {offsets = [7, 0], sizes = [1, 32], strides = [1, 1]} : vector<8x32xf32> to vector<1x32xf32>
    %74 = arith.addf %72, %73 : vector<1x32xf32>
    %75 = math.tanh %74 : vector<1x32xf32>
    %76 = tpu.concatenate %26, %33, %40, %47, %54, %61, %68, %75 in 0 : vector<1x32xf32>, vector<1x32xf32>, vector<1x32xf32>, vector<1x32xf32>, vector<1x32xf32>, vector<1x32xf32>, vector<1x32xf32>, vector<1x32xf32> -> vector<8x32xf32>
    %c1 = arith.constant 1 : index
    %c0_32 = arith.constant 0 : index
    %77 = vector.load %arg6[%c1, %c0_32] : memref<9x32xf32, #tpu.memory_space<vmem>>, vector<8x32xf32>
    tpu.vector_store %arg6[%c1, %c0_32], %76 {strides = array<i32>} : memref<9x32xf32, #tpu.memory_space<vmem>>, vector<8x32xf32>,
    %c0_33 = arith.constant 0 : index
    %c0_34 = arith.constant 0 : index
    %78 = vector.load %arg5[%c0_33, %c0_34] : memref<32x2xf32, #tpu.memory_space<vmem>>, vector<32x2xf32>
    %cst_35 = arith.constant dense<0.000000e+00> : vector<8x2xf32>
    %79 = tpu.matmul %76, %78, %cst_35 {dimension_numbers = #tpu.dot_dimension_numbers<[1], [0], [0], [1], [0, 0, 1, 1], [], []>} : vector<8x32xf32>, vector<32x2xf32>, vector<8x2xf32> -> vector<8x2xf32>
    %c0_36 = arith.constant 0 : index
    %c0_37 = arith.constant 0 : index
    %80 = vector.load %arg7[%c0_36, %c0_37] : memref<8x2xf32, #tpu.memory_space<vmem>>, vector<8x2xf32>
    tpu.vector_store %arg7[%c0_36, %c0_37], %79 {strides = array<i32>} : memref<8x2xf32, #tpu.memory_space<vmem>>, vector<8x2xf32>,
    return
  }
}

</mosaic_0001>

<llo_original>
// kernel: rnn_forward.1
$region0: #{rnn_forward.1}
  #allocation0 [shape = 'u32[]', space=smem, size = 0x4, offset = 0x4, fixed_abs, tag = 'smem constant byte address 0x4 - core index']
  #allocation1 [shape = 'u32[144,128]{1,0:T(1,128)}', space=vmem, size = 0x12000, scoped, tag = 'internal scratch']
  #allocation2 [shape = 'f32[8,32]{1,0:T(8,128)}', space=vmem, size = 0x1000, scoped, tag = 'scratch operand']
  %s0 = inlined_call_operand.vmem [shape: f32[8,4], index: 0, kind: input, shape index: {}]
  %s1 = inlined_call_operand.vmem [shape: f32[8,32], index: 1, kind: input, shape index: {}]
  %s2 = inlined_call_operand.vmem [shape: f32[1,32], index: 2, kind: input, shape index: {}]
  %s3 = inlined_call_operand.vmem [shape: f32[4,32], index: 3, kind: input, shape index: {}]
  %s4 = inlined_call_operand.vmem [shape: f32[32,32], index: 4, kind: input, shape index: {}]
  %s5 = inlined_call_operand.vmem [shape: f32[32,2], index: 5, kind: input, shape index: {}]
  %s6 = inlined_call_operand.hbm [shape: f32[9,32], index: 6, kind: output, shape index: {0}]
  %s7 = inlined_call_operand.vmem [shape: f32[8,2], index: 7, kind: output, shape index: {1}]
  %8 = xla_tuple %s6, %s7
  %s9 = sld [smem:[#allocation0]]
  $region42: #{rnn_forward.1} parent=0
    _
  %s11 = ssub.s32 1, %s9
  %s12 = scalar_select 0, %s11, %s9
  $region1: #{rnn_forward.1} parent=0
    #allocation3 [shape = 'u8[8192]{0}', space=vmem, size = 0x2000, scoped, tag = 'output window, operand 0, single buffered']
    #allocation4 [shape = 's32[1]{0}', space=sflag, size = 0x4, scoped, tag = 'scoped memory for rnn_forward.1']
    %13 = vsyncpa [#allocation4], 0
    // Predicated region
    $region2: #{rnn_forward.1} parent=1 // pred_check
      _
    $region3: #{rnn_forward.1} parent=1 // pred_check_branch
      %15 = sbr.rel (0) target = $region5
    $region4: #{rnn_forward.1} parent=1 // pred_region
      _
    $region5: #{rnn_forward.1} parent=1 // pred_fallthru
      _
    // Predicated region
    $region6: #{rnn_forward.1} parent=1 // pred_check
      _
    $region7: #{rnn_forward.1} parent=1 // pred_check_branch
      %17 = sbr.rel (0) target = $region9
    $region8: #{rnn_forward.1} parent=1 // pred_region
      _
    $region9: #{rnn_forward.1} parent=1 // pred_fallthru
      _
    // Predicated region
    $region10: #{rnn_forward.1} parent=1 // pred_check
      _
    $region11: #{rnn_forward.1} parent=1 // pred_check_branch
      %19 = sbr.rel (0) target = $region13
    $region12: #{rnn_forward.1} parent=1 // pred_region
      _
    $region13: #{rnn_forward.1} parent=1 // pred_fallthru
      _
    // Predicated region
    $region14: #{rnn_forward.1} parent=1 // pred_check
      _
    $region15: #{rnn_forward.1} parent=1 // pred_check_branch
      %21 = sbr.rel (0) target = $region17
    $region16: #{rnn_forward.1} parent=1 // pred_region
      _
    $region17: #{rnn_forward.1} parent=1 // pred_fallthru
      _
    // Predicated region
    $region18: #{rnn_forward.1} parent=1 // pred_check
      _
    $region19: #{rnn_forward.1} parent=1 // pred_check_branch
      %23 = sbr.rel (0) target = $region21
    $region20: #{rnn_forward.1} parent=1 // pred_region
      _
    $region21: #{rnn_forward.1} parent=1 // pred_fallthru
      _
    // Predicated region
    $region22: #{rnn_forward.1} parent=1 // pred_check
      _
    $region23: #{rnn_forward.1} parent=1 // pred_check_branch
      %25 = sbr.rel (0) target = $region25
    $region24: #{rnn_forward.1} parent=1 // pred_region
      _
    $region25: #{rnn_forward.1} parent=1 // pred_fallthru
      _
    %v26 = vld [vmem:[%s2] sm:$0x1]
    %v27 = vadd.f32 %v26, 1.0
    %v28 = vsub.f32 1.0, %v26
    %v29 = vrcp.pop %v28
    %v30 = vmul.f32 %v27, %v29
    %v31 = vlog2.pop %v30
    %v32 = vmul.f32 %v31, 0.6931472
    %v33 = vmul.f32 %v32, 0.5
    %v34 = vld [vmem:[%s4] sm:$0xff]
    %v35 = vld [vmem:[%s4 + $0x8] sm:$0xff]
    %v36 = vld [vmem:[%s4 + $0x10] sm:$0xff]
    %v37 = vld [vmem:[%s4 + $0x18] sm:$0xff]
    %v38 = vmul.f32 %v34, 0.1
    %v39 = vmul.f32 %v35, 0.1
    %v40 = vmul.f32 %v36, 0.1
    %v41 = vmul.f32 %v37, 0.1
    %v42 = vld [vmem:[%s0] sm:$0xff]
    %v43 = vld [vmem:[%s3] sm:$0xf]
    %v44 = vld [vmem:[%s1] sm:$0xff]
    %vm45 = vcmask 31744
    %v47 = vsel %vm45, %v42, 0
    %vm49 = vcmask 1043456
    %v51 = vsel %vm49, %v43, 0
    %53 = vmatprep.subr.mxu0 0.0
    %54 = vmatpush1.msra.mxu0 %v51
    %55 = vmatprep.subr.mxu0 0.0
    %56 = vmatpush1.msra.mxu0 0.0
    %57 = vmatprep.subr.mxu0 0.0
    %58 = vmatpush1.msra.mxu0 0.0
    %59 = vmatprep.subr.mxu0 0.0
    %60 = vmatpush1.msra.mxu0 0.0
    %61 = vmatprep.subr.mxu0 0.0
    %62 = vmatpush1.msra.mxu0 0.0
    %63 = vmatprep.subr.mxu0 0.0
    %64 = vmatpush1.msra.mxu0 0.0
    %65 = vmatprep.subr.mxu0 0.0
    %66 = vmatpush1.msra.mxu0 0.0
    %67 = vmatprep.subr.mxu0 0.0
    %68 = vmatpush1.msra.mxu0 0.0
    %69 = vmatprep.subr.mxu0 0.0
    %70 = vmatpush1.msra.mxu0 0.0
    %71 = vmatprep.subr.mxu0 0.0
    %72 = vmatpush1.msra.mxu0 0.0
    %73 = vmatprep.subr.mxu0 0.0
    %74 = vmatpush1.msra.mxu0 0.0
    %75 = vmatprep.subr.mxu0 0.0
    %76 = vmatpush1.msra.mxu0 0.0
    %77 = vmatprep.subr.mxu0 0.0
    %78 = vmatpush1.msra.mxu0 0.0
    %79 = vmatprep.subr.mxu0 0.0
    %80 = vmatpush1.msra.mxu0 0.0
    %81 = vmatprep.subr.mxu0 0.0
    %82 = vmatpush1.msra.mxu0 0.0
    %83 = vmatprep.subr.mxu0 0.0
    %84 = vmatpush1.msra.mxu0 0.0
    %85 = vmatprep.subr.mxu0 0.0
    %86 = vmatpush1.msra.mxu0 0.0
    %87 = vmatprep.subr.mxu0 0.0
    %88 = vmatpush1.msra.mxu0 0.0
    %89 = vmatprep.subr.mxu0 0.0
    %90 = vmatpush1.msra.mxu0 0.0
    %91 = vmatprep.subr.mxu0 0.0
    %92 = vmatpush1.msra.mxu0 0.0
    %93 = vmatprep.subr.mxu0 0.0
    %94 = vmatpush1.msra.mxu0 0.0
    %95 = vmatprep.subr.mxu0 0.0
    %96 = vmatpush1.msra.mxu0 0.0
    %97 = vmatprep.subr.mxu0 0.0
    %98 = vmatpush1.msra.mxu0 0.0
    %99 = vmatprep.subr.mxu0 0.0
    %100 = vmatpush1.msra.mxu0 0.0
    %101 = vmatprep.subr.mxu0 0.0
    %102 = vmatpush1.msra.mxu0 0.0
    %103 = vmatprep.subr.mxu0 0.0
    %104 = vmatpush1.msra.mxu0 0.0
    %105 = vmatprep.subr.mxu0 0.0
    %106 = vmatpush1.msra.mxu0 0.0
    %107 = vmatprep.subr.mxu0 0.0
    %108 = vmatpush1.msra.mxu0 0.0
    %109 = vmatprep.subr.mxu0 0.0
    %110 = vmatpush1.msra.mxu0 0.0
    %111 = vmatprep.subr.mxu0 0.0
    %112 = vmatpush1.msra.mxu0 0.0
    %113 = vmatprep.subr.mxu0 0.0
    %114 = vmatpush1.msra.mxu0 0.0
    %115 = vmatprep.subr.mxu0 0.0
    %116 = vmatpush1.msra.mxu0 0.0
    %117 = vmatprep.mubr.f32.mxu0 0.0
    %118 = vmatmul.mubr.f32.gmra.mrb[0].mxu0 %v47
    %v119 = vpop.f32.mrb[0].mxu0
    %v120 = vadd.f32 %v44, %v119
    %v121 = vpop.f32.mrb[0].mxu0
    %122 = vdwg.mxu0
    %v123 = vmul.f32 %v120, 0.1
    %vm124 = vcmask 253952
    %125 = vst.msk [vmem:[#allocation3] sm:$0x1] %vm124, %v26
    %vm126 = vcmask 261120
    %v128 = vsel %vm126, %v26, 0
    %130 = vmatprep.subr.mxu0 0.0
    %131 = vmatpush1.msra.mxu0 %v38
    %132 = vmatprep.subr.mxu0 0.0
    %133 = vmatpush1.msra.mxu0 %v39
    %134 = vmatprep.subr.mxu0 0.0
    %135 = vmatpush1.msra.mxu0 %v40
    %136 = vmatprep.subr.mxu0 0.0
    %137 = vmatpush1.msra.mxu0 %v41
    %138 = vmatprep.subr.mxu0 0.0
    %139 = vmatpush1.msra.mxu0 0.0
    %140 = vmatprep.subr.mxu0 0.0
    %141 = vmatpush1.msra.mxu0 0.0
    %142 = vmatprep.subr.mxu0 0.0
    %143 = vmatpush1.msra.mxu0 0.0
    %144 = vmatprep.subr.mxu0 0.0
    %145 = vmatpush1.msra.mxu0 0.0
    %146 = vmatprep.subr.mxu0 0.0
    %147 = vmatpush1.msra.mxu0 0.0
    %148 = vmatprep.subr.mxu0 0.0
    %149 = vmatpush1.msra.mxu0 0.0
    %150 = vmatprep.subr.mxu0 0.0
    %151 = vmatpush1.msra.mxu0 0.0
    %152 = vmatprep.subr.mxu0 0.0
    %153 = vmatpush1.msra.mxu0 0.0
    %154 = vmatprep.subr.mxu0 0.0
    %155 = vmatpush1.msra.mxu0 0.0
    %156 = vmatprep.subr.mxu0 0.0
    %157 = vmatpush1.msra.mxu0 0.0
    %158 = vmatprep.subr.mxu0 0.0
    %159 = vmatpush1.msra.mxu0 0.0
    %160 = vmatprep.subr.mxu0 0.0
    %161 = vmatpush1.msra.mxu0 0.0
    %162 = vmatprep.subr.mxu0 0.0
    %163 = vmatpush1.msra.mxu0 0.0
    %164 = vmatprep.subr.mxu0 0.0
    %165 = vmatpush1.msra.mxu0 0.0
    %166 = vmatprep.subr.mxu0 0.0
    %167 = vmatpush1.msra.mxu0 0.0
    %168 = vmatprep.subr.mxu0 0.0
    %169 = vmatpush1.msra.mxu0 0.0
    %170 = vmatprep.subr.mxu0 0.0
    %171 = vmatpush1.msra.mxu0 0.0
    %172 = vmatprep.subr.mxu0 0.0
    %173 = vmatpush1.msra.mxu0 0.0
    %174 = vmatprep.subr.mxu0 0.0
    %175 = vmatpush1.msra.mxu0 0.0
    %176 = vmatprep.subr.mxu0 0.0
    %177 = vmatpush1.msra.mxu0 0.0
    %178 = vmatprep.subr.mxu0 0.0
    %179 = vmatpush1.msra.mxu0 0.0
    %180 = vmatprep.subr.mxu0 0.0
    %181 = vmatpush1.msra.mxu0 0.0
    %182 = vmatprep.subr.mxu0 0.0
    %183 = vmatpush1.msra.mxu0 0.0
    %184 = vmatprep.subr.mxu0 0.0
    %185 = vmatpush1.msra.mxu0 0.0
    %186 = vmatprep.subr.mxu0 0.0
    %187 = vmatpush1.msra.mxu0 0.0
    %188 = vmatprep.subr.mxu0 0.0
    %189 = vmatpush1.msra.mxu0 0.0
    %190 = vmatprep.subr.mxu0 0.0
    %191 = vmatpush1.msra.mxu0 0.0
    %192 = vmatprep.subr.mxu0 0.0
    %193 = vmatpush1.msra.mxu0 0.0
    %194 = vmatprep.mubr.f32.mxu0 0.0
    %195 = vmatmul.mubr.f32.gmra.mrb[0].mxu0 %v128
    %v196 = vpop.f32.mrb[0].mxu0
    %v197 = vadd.f32 0.0, %v196
    %v198 = vpop.f32.mrb[0].mxu0
    %199 = vdwg.mxu0
    %v200 = vmul.f32 %v33, 0.9
    %v201 = vadd.f32 %v200, %v197
    %v202 = vadd.f32 %v201, %v123
    %v203 = vtanh.pop %v202
    %v205 = vsel %vm126, %v203, 0
    %207 = vmatprep.subr.mxu0 0.0
    %208 = vmatpush1.msra.mxu0 %v38
    %209 = vmatprep.subr.mxu0 0.0
    %210 = vmatpush1.msra.mxu0 %v39
    %211 = vmatprep.subr.mxu0 0.0
    %212 = vmatpush1.msra.mxu0 %v40
    %213 = vmatprep.subr.mxu0 0.0
    %214 = vmatpush1.msra.mxu0 %v41
    %215 = vmatprep.subr.mxu0 0.0
    %216 = vmatpush1.msra.mxu0 0.0
    %217 = vmatprep.subr.mxu0 0.0
    %218 = vmatpush1.msra.mxu0 0.0
    %219 = vmatprep.subr.mxu0 0.0
    %220 = vmatpush1.msra.mxu0 0.0
    %221 = vmatprep.subr.mxu0 0.0
    %222 = vmatpush1.msra.mxu0 0.0
    %223 = vmatprep.subr.mxu0 0.0
    %224 = vmatpush1.msra.mxu0 0.0
    %225 = vmatprep.subr.mxu0 0.0
    %226 = vmatpush1.msra.mxu0 0.0
    %227 = vmatprep.subr.mxu0 0.0
    %228 = vmatpush1.msra.mxu0 0.0
    %229 = vmatprep.subr.mxu0 0.0
    %230 = vmatpush1.msra.mxu0 0.0
    %231 = vmatprep.subr.mxu0 0.0
    %232 = vmatpush1.msra.mxu0 0.0
    %233 = vmatprep.subr.mxu0 0.0
    %234 = vmatpush1.msra.mxu0 0.0
    %235 = vmatprep.subr.mxu0 0.0
    %236 = vmatpush1.msra.mxu0 0.0
    %237 = vmatprep.subr.mxu0 0.0
    %238 = vmatpush1.msra.mxu0 0.0
    %239 = vmatprep.subr.mxu0 0.0
    %240 = vmatpush1.msra.mxu0 0.0
    %241 = vmatprep.subr.mxu0 0.0
    %242 = vmatpush1.msra.mxu0 0.0
    %243 = vmatprep.subr.mxu0 0.0
    %244 = vmatpush1.msra.mxu0 0.0
    %245 = vmatprep.subr.mxu0 0.0
    %246 = vmatpush1.msra.mxu0 0.0
    %247 = vmatprep.subr.mxu0 0.0
    %248 = vmatpush1.msra.mxu0 0.0
    %249 = vmatprep.subr.mxu0 0.0
    %250 = vmatpush1.msra.mxu0 0.0
    %251 = vmatprep.subr.mxu0 0.0
    %252 = vmatpush1.msra.mxu0 0.0
    %253 = vmatprep.subr.mxu0 0.0
    %254 = vmatpush1.msra.mxu0 0.0
    %255 = vmatprep.subr.mxu0 0.0
    %256 = vmatpush1.msra.mxu0 0.0
    %257 = vmatprep.subr.mxu0 0.0
    %258 = vmatpush1.msra.mxu0 0.0
    %259 = vmatprep.subr.mxu0 0.0
    %260 = vmatpush1.msra.mxu0 0.0
    %261 = vmatprep.subr.mxu0 0.0
    %262 = vmatpush1.msra.mxu0 0.0
    %263 = vmatprep.subr.mxu0 0.0
    %264 = vmatpush1.msra.mxu0 0.0
    %265 = vmatprep.subr.mxu0 0.0
    %266 = vmatpush1.msra.mxu0 0.0
    %267 = vmatprep.subr.mxu0 0.0
    %268 = vmatpush1.msra.mxu0 0.0
    %269 = vmatprep.subr.mxu0 0.0
    %270 = vmatpush1.msra.mxu0 0.0
    %271 = vmatprep.mubr.f32.mxu0 0.0
    %272 = vmatmul.mubr.f32.gmra.mrb[0].mxu0 %v205
    %v273 = vpop.f32.mrb[0].mxu0
    %v274 = vadd.f32 0.0, %v273
    %v275 = vpop.f32.mrb[0].mxu0
    %276 = vdwg.mxu0
    %v277 = vmul.f32 %v202, 0.9
    %v278 = vadd.f32 %v277, %v274
    %v281 = vunpack.c.l.s4 1966171168
    %v282 = vunpack.c.0.s8 %v281
    %v283 = vlaneseq
    %v284 = vshrl.u32 %v283, 7
    %v285 = vsub.s32 %v282, %v284
    %v286 = vrot.slane %v123, %v285
    %v287 = vcombine.high %v286, %v286
    %v289 = vunpack.c.l.s4 1966171168
    %v290 = vunpack.c.0.s8 %v289
    %v291 = vlaneseq
    %v292 = vshrl.u32 %v291, 7
    %v293 = vsub.s32 %v290, %v292
    %v294 = vrot.slane %v286, %v293
    %v296 = vunpack.c.l.s4 1966171168
    %v297 = vunpack.c.0.s8 %v296
    %v298 = vlaneseq
    %v299 = vshrl.u32 %v298, 7
    %v300 = vsub.s32 %v297, %v299
    %v301 = vrot.slane %v287, %v300
    %v303 = vadd.f32 %v278, %v301
    %v304 = vtanh.pop %v303
    %v306 = vsel %vm126, %v304, 0
    %308 = vmatprep.subr.mxu0 0.0
    %309 = vmatpush1.msra.mxu0 %v38
    %310 = vmatprep.subr.mxu0 0.0
    %311 = vmatpush1.msra.mxu0 %v39
    %312 = vmatprep.subr.mxu0 0.0
    %313 = vmatpush1.msra.mxu0 %v40
    %314 = vmatprep.subr.mxu0 0.0
    %315 = vmatpush1.msra.mxu0 %v41
    %316 = vmatprep.subr.mxu0 0.0
    %317 = vmatpush1.msra.mxu0 0.0
    %318 = vmatprep.subr.mxu0 0.0
    %319 = vmatpush1.msra.mxu0 0.0
    %320 = vmatprep.subr.mxu0 0.0
    %321 = vmatpush1.msra.mxu0 0.0
    %322 = vmatprep.subr.mxu0 0.0
    %323 = vmatpush1.msra.mxu0 0.0
    %324 = vmatprep.subr.mxu0 0.0
    %325 = vmatpush1.msra.mxu0 0.0
    %326 = vmatprep.subr.mxu0 0.0
    %327 = vmatpush1.msra.mxu0 0.0
    %328 = vmatprep.subr.mxu0 0.0
    %329 = vmatpush1.msra.mxu0 0.0
    %330 = vmatprep.subr.mxu0 0.0
    %331 = vmatpush1.msra.mxu0 0.0
    %332 = vmatprep.subr.mxu0 0.0
    %333 = vmatpush1.msra.mxu0 0.0
    %334 = vmatprep.subr.mxu0 0.0
    %335 = vmatpush1.msra.mxu0 0.0
    %336 = vmatprep.subr.mxu0 0.0
    %337 = vmatpush1.msra.mxu0 0.0
    %338 = vmatprep.subr.mxu0 0.0
    %339 = vmatpush1.msra.mxu0 0.0
    %340 = vmatprep.subr.mxu0 0.0
    %341 = vmatpush1.msra.mxu0 0.0
    %342 = vmatprep.subr.mxu0 0.0
    %343 = vmatpush1.msra.mxu0 0.0
    %344 = vmatprep.subr.mxu0 0.0
    %345 = vmatpush1.msra.mxu0 0.0
    %346 = vmatprep.subr.mxu0 0.0
    %347 = vmatpush1.msra.mxu0 0.0
    %348 = vmatprep.subr.mxu0 0.0
    %349 = vmatpush1.msra.mxu0 0.0
    %350 = vmatprep.subr.mxu0 0.0
    %351 = vmatpush1.msra.mxu0 0.0
    %352 = vmatprep.subr.mxu0 0.0
    %353 = vmatpush1.msra.mxu0 0.0
    %354 = vmatprep.subr.mxu0 0.0
    %355 = vmatpush1.msra.mxu0 0.0
    %356 = vmatprep.subr.mxu0 0.0
    %357 = vmatpush1.msra.mxu0 0.0
    %358 = vmatprep.subr.mxu0 0.0
    %359 = vmatpush1.msra.mxu0 0.0
    %360 = vmatprep.subr.mxu0 0.0
    %361 = vmatpush1.msra.mxu0 0.0
    %362 = vmatprep.subr.mxu0 0.0
    %363 = vmatpush1.msra.mxu0 0.0
    %364 = vmatprep.subr.mxu0 0.0
    %365 = vmatpush1.msra.mxu0 0.0
    %366 = vmatprep.subr.mxu0 0.0
    %367 = vmatpush1.msra.mxu0 0.0
    %368 = vmatprep.subr.mxu0 0.0
    %369 = vmatpush1.msra.mxu0 0.0
    %370 = vmatprep.subr.mxu0 0.0
    %371 = vmatpush1.msra.mxu0 0.0
    %372 = vmatprep.mubr.f32.mxu0 0.0
    %373 = vmatmul.mubr.f32.gmra.mrb[0].mxu0 %v306
    %v374 = vpop.f32.mrb[0].mxu0
    %v375 = vadd.f32 0.0, %v374
    %v376 = vpop.f32.mrb[0].mxu0
    %377 = vdwg.mxu0
    %v378 = vmul.f32 %v303, 0.9
    %v379 = vadd.f32 %v378, %v375
    %v380 = vcombine.high %v294, %v294
    %v382 = vadd.f32 %v379, %v380
    %v383 = vtanh.pop %v382
    %v385 = vsel %vm126, %v383, 0
    %387 = vmatprep.subr.mxu0 0.0
    %388 = vmatpush1.msra.mxu0 %v38
    %389 = vmatprep.subr.mxu0 0.0
    %390 = vmatpush1.msra.mxu0 %v39
    %391 = vmatprep.subr.mxu0 0.0
    %392 = vmatpush1.msra.mxu0 %v40
    %393 = vmatprep.subr.mxu0 0.0
    %394 = vmatpush1.msra.mxu0 %v41
    %395 = vmatprep.subr.mxu0 0.0
    %396 = vmatpush1.msra.mxu0 0.0
    %397 = vmatprep.subr.mxu0 0.0
    %398 = vmatpush1.msra.mxu0 0.0
    %399 = vmatprep.subr.mxu0 0.0
    %400 = vmatpush1.msra.mxu0 0.0
    %401 = vmatprep.subr.mxu0 0.0
    %402 = vmatpush1.msra.mxu0 0.0
    %403 = vmatprep.subr.mxu0 0.0
    %404 = vmatpush1.msra.mxu0 0.0
    %405 = vmatprep.subr.mxu0 0.0
    %406 = vmatpush1.msra.mxu0 0.0
    %407 = vmatprep.subr.mxu0 0.0
    %408 = vmatpush1.msra.mxu0 0.0
    %409 = vmatprep.subr.mxu0 0.0
    %410 = vmatpush1.msra.mxu0 0.0
    %411 = vmatprep.subr.mxu0 0.0
    %412 = vmatpush1.msra.mxu0 0.0
    %413 = vmatprep.subr.mxu0 0.0
    %414 = vmatpush1.msra.mxu0 0.0
    %415 = vmatprep.subr.mxu0 0.0
    %416 = vmatpush1.msra.mxu0 0.0
    %417 = vmatprep.subr.mxu0 0.0
    %418 = vmatpush1.msra.mxu0 0.0
    %419 = vmatprep.subr.mxu0 0.0
    %420 = vmatpush1.msra.mxu0 0.0
    %421 = vmatprep.subr.mxu0 0.0
    %422 = vmatpush1.msra.mxu0 0.0
    %423 = vmatprep.subr.mxu0 0.0
    %424 = vmatpush1.msra.mxu0 0.0
    %425 = vmatprep.subr.mxu0 0.0
    %426 = vmatpush1.msra.mxu0 0.0
    %427 = vmatprep.subr.mxu0 0.0
    %428 = vmatpush1.msra.mxu0 0.0
    %429 = vmatprep.subr.mxu0 0.0
    %430 = vmatpush1.msra.mxu0 0.0
    %431 = vmatprep.subr.mxu0 0.0
    %432 = vmatpush1.msra.mxu0 0.0
    %433 = vmatprep.subr.mxu0 0.0
    %434 = vmatpush1.msra.mxu0 0.0
    %435 = vmatprep.subr.mxu0 0.0
    %436 = vmatpush1.msra.mxu0 0.0
    %437 = vmatprep.subr.mxu0 0.0
    %438 = vmatpush1.msra.mxu0 0.0
    %439 = vmatprep.subr.mxu0 0.0
    %440 = vmatpush1.msra.mxu0 0.0
    %441 = vmatprep.subr.mxu0 0.0
    %442 = vmatpush1.msra.mxu0 0.0
    %443 = vmatprep.subr.mxu0 0.0
    %444 = vmatpush1.msra.mxu0 0.0
    %445 = vmatprep.subr.mxu0 0.0
    %446 = vmatpush1.msra.mxu0 0.0
    %447 = vmatprep.subr.mxu0 0.0
    %448 = vmatpush1.msra.mxu0 0.0
    %449 = vmatprep.subr.mxu0 0.0
    %450 = vmatpush1.msra.mxu0 0.0
    %451 = vmatprep.mubr.f32.mxu0 0.0
    %452 = vmatmul.mubr.f32.gmra.mrb[0].mxu0 %v385
    %v453 = vpop.f32.mrb[0].mxu0
    %v454 = vadd.f32 0.0, %v453
    %v455 = vpop.f32.mrb[0].mxu0
    %456 = vdwg.mxu0
    %v457 = vmul.f32 %v382, 0.9
    %v458 = vadd.f32 %v457, %v454
    %v459 = vcombine.high %v301, %v301
    %v461 = vadd.f32 %v458, %v459
    %v462 = vtanh.pop %v461
    %v464 = vsel %vm126, %v462, 0
    %466 = vmatprep.subr.mxu0 0.0
    %467 = vmatpush1.msra.mxu0 %v38
    %468 = vmatprep.subr.mxu0 0.0
    %469 = vmatpush1.msra.mxu0 %v39
    %470 = vmatprep.subr.mxu0 0.0
    %471 = vmatpush1.msra.mxu0 %v40
    %472 = vmatprep.subr.mxu0 0.0
    %473 = vmatpush1.msra.mxu0 %v41
    %474 = vmatprep.subr.mxu0 0.0
    %475 = vmatpush1.msra.mxu0 0.0
    %476 = vmatprep.subr.mxu0 0.0
    %477 = vmatpush1.msra.mxu0 0.0
    %478 = vmatprep.subr.mxu0 0.0
    %479 = vmatpush1.msra.mxu0 0.0
    %480 = vmatprep.subr.mxu0 0.0
    %481 = vmatpush1.msra.mxu0 0.0
    %482 = vmatprep.subr.mxu0 0.0
    %483 = vmatpush1.msra.mxu0 0.0
    %484 = vmatprep.subr.mxu0 0.0
    %485 = vmatpush1.msra.mxu0 0.0
    %486 = vmatprep.subr.mxu0 0.0
    %487 = vmatpush1.msra.mxu0 0.0
    %488 = vmatprep.subr.mxu0 0.0
    %489 = vmatpush1.msra.mxu0 0.0
    %490 = vmatprep.subr.mxu0 0.0
    %491 = vmatpush1.msra.mxu0 0.0
    %492 = vmatprep.subr.mxu0 0.0
    %493 = vmatpush1.msra.mxu0 0.0
    %494 = vmatprep.subr.mxu0 0.0
    %495 = vmatpush1.msra.mxu0 0.0
    %496 = vmatprep.subr.mxu0 0.0
    %497 = vmatpush1.msra.mxu0 0.0
    %498 = vmatprep.subr.mxu0 0.0
    %499 = vmatpush1.msra.mxu0 0.0
    %500 = vmatprep.subr.mxu0 0.0
    %501 = vmatpush1.msra.mxu0 0.0
    %502 = vmatprep.subr.mxu0 0.0
    %503 = vmatpush1.msra.mxu0 0.0
    %504 = vmatprep.subr.mxu0 0.0
    %505 = vmatpush1.msra.mxu0 0.0
    %506 = vmatprep.subr.mxu0 0.0
    %507 = vmatpush1.msra.mxu0 0.0
    %508 = vmatprep.subr.mxu0 0.0
    %509 = vmatpush1.msra.mxu0 0.0
    %510 = vmatprep.subr.mxu0 0.0
    %511 = vmatpush1.msra.mxu0 0.0
    %512 = vmatprep.subr.mxu0 0.0
    %513 = vmatpush1.msra.mxu0 0.0
    %514 = vmatprep.subr.mxu0 0.0
    %515 = vmatpush1.msra.mxu0 0.0
    %516 = vmatprep.subr.mxu0 0.0
    %517 = vmatpush1.msra.mxu0 0.0
    %518 = vmatprep.subr.mxu0 0.0
    %519 = vmatpush1.msra.mxu0 0.0
    %520 = vmatprep.subr.mxu0 0.0
    %521 = vmatpush1.msra.mxu0 0.0
    %522 = vmatprep.subr.mxu0 0.0
    %523 = vmatpush1.msra.mxu0 0.0
    %524 = vmatprep.subr.mxu0 0.0
    %525 = vmatpush1.msra.mxu0 0.0
    %526 = vmatprep.subr.mxu0 0.0
    %527 = vmatpush1.msra.mxu0 0.0
    %528 = vmatprep.subr.mxu0 0.0
    %529 = vmatpush1.msra.mxu0 0.0
    %530 = vmatprep.mubr.f32.mxu0 0.0
    %531 = vmatmul.mubr.f32.gmra.mrb[0].mxu0 %v464
    %v532 = vpop.f32.mrb[0].mxu0
    %v533 = vadd.f32 0.0, %v532
    %v534 = vpop.f32.mrb[0].mxu0
    %535 = vdwg.mxu0
    %v536 = vmul.f32 %v461, 0.9
    %v537 = vadd.f32 %v536, %v533
    %v538 = vcombine.high %v123, %v123
    %v540 = vunpack.c.l.s4 1966171168
    %v541 = vunpack.c.0.s8 %v540
    %v542 = vlaneseq
    %v543 = vshrl.u32 %v542, 7
    %v544 = vsub.s32 %v541, %v543
    %v545 = vrot.slane %v538, %v544
    %v547 = vunpack.c.l.s4 1966171168
    %v548 = vunpack.c.0.s8 %v547
    %v549 = vlaneseq
    %v550 = vshrl.u32 %v549, 7
    %v551 = vsub.s32 %v548, %v550
    %v552 = vrot.slane %v545, %v551
    %v554 = vadd.f32 %v537, %v552
    %v555 = vtanh.pop %v554
    %v557 = vsel %vm126, %v555, 0
    %559 = vmatprep.subr.mxu0 0.0
    %560 = vmatpush1.msra.mxu0 %v38
    %561 = vmatprep.subr.mxu0 0.0
    %562 = vmatpush1.msra.mxu0 %v39
    %563 = vmatprep.subr.mxu0 0.0
    %564 = vmatpush1.msra.mxu0 %v40
    %565 = vmatprep.subr.mxu0 0.0
    %566 = vmatpush1.msra.mxu0 %v41
    %567 = vmatprep.subr.mxu0 0.0
    %568 = vmatpush1.msra.mxu0 0.0
    %569 = vmatprep.subr.mxu0 0.0
    %570 = vmatpush1.msra.mxu0 0.0
    %571 = vmatprep.subr.mxu0 0.0
    %572 = vmatpush1.msra.mxu0 0.0
    %573 = vmatprep.subr.mxu0 0.0
    %574 = vmatpush1.msra.mxu0 0.0
    %575 = vmatprep.subr.mxu0 0.0
    %576 = vmatpush1.msra.mxu0 0.0
    %577 = vmatprep.subr.mxu0 0.0
    %578 = vmatpush1.msra.mxu0 0.0
    %579 = vmatprep.subr.mxu0 0.0
    %580 = vmatpush1.msra.mxu0 0.0
    %581 = vmatprep.subr.mxu0 0.0
    %582 = vmatpush1.msra.mxu0 0.0
    %583 = vmatprep.subr.mxu0 0.0
    %584 = vmatpush1.msra.mxu0 0.0
    %585 = vmatprep.subr.mxu0 0.0
    %586 = vmatpush1.msra.mxu0 0.0
    %587 = vmatprep.subr.mxu0 0.0
    %588 = vmatpush1.msra.mxu0 0.0
    %589 = vmatprep.subr.mxu0 0.0
    %590 = vmatpush1.msra.mxu0 0.0
    %591 = vmatprep.subr.mxu0 0.0
    %592 = vmatpush1.msra.mxu0 0.0
    %593 = vmatprep.subr.mxu0 0.0
    %594 = vmatpush1.msra.mxu0 0.0
    %595 = vmatprep.subr.mxu0 0.0
    %596 = vmatpush1.msra.mxu0 0.0
    %597 = vmatprep.subr.mxu0 0.0
    %598 = vmatpush1.msra.mxu0 0.0
    %599 = vmatprep.subr.mxu0 0.0
    %600 = vmatpush1.msra.mxu0 0.0
    %601 = vmatprep.subr.mxu0 0.0
    %602 = vmatpush1.msra.mxu0 0.0
    %603 = vmatprep.subr.mxu0 0.0
    %604 = vmatpush1.msra.mxu0 0.0
    %605 = vmatprep.subr.mxu0 0.0
    %606 = vmatpush1.msra.mxu0 0.0
    %607 = vmatprep.subr.mxu0 0.0
    %608 = vmatpush1.msra.mxu0 0.0
    %609 = vmatprep.subr.mxu0 0.0
    %610 = vmatpush1.msra.mxu0 0.0
    %611 = vmatprep.subr.mxu0 0.0
    %612 = vmatpush1.msra.mxu0 0.0
    %613 = vmatprep.subr.mxu0 0.0
    %614 = vmatpush1.msra.mxu0 0.0
    %615 = vmatprep.subr.mxu0 0.0
    %616 = vmatpush1.msra.mxu0 0.0
    %617 = vmatprep.subr.mxu0 0.0
    %618 = vmatpush1.msra.mxu0 0.0
    %619 = vmatprep.subr.mxu0 0.0
    %620 = vmatpush1.msra.mxu0 0.0
    %621 = vmatprep.subr.mxu0 0.0
    %622 = vmatpush1.msra.mxu0 0.0
    %623 = vmatprep.mubr.f32.mxu0 0.0
    %624 = vmatmul.mubr.f32.gmra.mrb[0].mxu0 %v557
    %v625 = vpop.f32.mrb[0].mxu0
    %v626 = vadd.f32 0.0, %v625
    %v627 = vpop.f32.mrb[0].mxu0
    %628 = vdwg.mxu0
    %v629 = vmul.f32 %v554, 0.9
    %v630 = vadd.f32 %v629, %v626
    %v631 = vcombine.high %v545, %v545
    %v633 = vunpack.c.l.s4 1966171168
    %v634 = vunpack.c.0.s8 %v633
    %v635 = vlaneseq
    %v636 = vshrl.u32 %v635, 7
    %v637 = vsub.s32 %v634, %v636
    %v638 = vrot.slane %v631, %v637
    %v640 = vadd.f32 %v630, %v638
    %v641 = vtanh.pop %v640
    %v643 = vsel %vm126, %v641, 0
    %645 = vmatprep.subr.mxu0 0.0
    %646 = vmatpush1.msra.mxu0 %v38
    %647 = vmatprep.subr.mxu0 0.0
    %648 = vmatpush1.msra.mxu0 %v39
    %649 = vmatprep.subr.mxu0 0.0
    %650 = vmatpush1.msra.mxu0 %v40
    %651 = vmatprep.subr.mxu0 0.0
    %652 = vmatpush1.msra.mxu0 %v41
    %653 = vmatprep.subr.mxu0 0.0
    %654 = vmatpush1.msra.mxu0 0.0
    %655 = vmatprep.subr.mxu0 0.0
    %656 = vmatpush1.msra.mxu0 0.0
    %657 = vmatprep.subr.mxu0 0.0
    %658 = vmatpush1.msra.mxu0 0.0
    %659 = vmatprep.subr.mxu0 0.0
    %660 = vmatpush1.msra.mxu0 0.0
    %661 = vmatprep.subr.mxu0 0.0
    %662 = vmatpush1.msra.mxu0 0.0
    %663 = vmatprep.subr.mxu0 0.0
    %664 = vmatpush1.msra.mxu0 0.0
    %665 = vmatprep.subr.mxu0 0.0
    %666 = vmatpush1.msra.mxu0 0.0
    %667 = vmatprep.subr.mxu0 0.0
    %668 = vmatpush1.msra.mxu0 0.0
    %669 = vmatprep.subr.mxu0 0.0
    %670 = vmatpush1.msra.mxu0 0.0
    %671 = vmatprep.subr.mxu0 0.0
    %672 = vmatpush1.msra.mxu0 0.0
    %673 = vmatprep.subr.mxu0 0.0
    %674 = vmatpush1.msra.mxu0 0.0
    %675 = vmatprep.subr.mxu0 0.0
    %676 = vmatpush1.msra.mxu0 0.0
    %677 = vmatprep.subr.mxu0 0.0
    %678 = vmatpush1.msra.mxu0 0.0
    %679 = vmatprep.subr.mxu0 0.0
    %680 = vmatpush1.msra.mxu0 0.0
    %681 = vmatprep.subr.mxu0 0.0
    %682 = vmatpush1.msra.mxu0 0.0
    %683 = vmatprep.subr.mxu0 0.0
    %684 = vmatpush1.msra.mxu0 0.0
    %685 = vmatprep.subr.mxu0 0.0
    %686 = vmatpush1.msra.mxu0 0.0
    %687 = vmatprep.subr.mxu0 0.0
    %688 = vmatpush1.msra.mxu0 0.0
    %689 = vmatprep.subr.mxu0 0.0
    %690 = vmatpush1.msra.mxu0 0.0
    %691 = vmatprep.subr.mxu0 0.0
    %692 = vmatpush1.msra.mxu0 0.0
    %693 = vmatprep.subr.mxu0 0.0
    %694 = vmatpush1.msra.mxu0 0.0
    %695 = vmatprep.subr.mxu0 0.0
    %696 = vmatpush1.msra.mxu0 0.0
    %697 = vmatprep.subr.mxu0 0.0
    %698 = vmatpush1.msra.mxu0 0.0
    %699 = vmatprep.subr.mxu0 0.0
    %700 = vmatpush1.msra.mxu0 0.0
    %701 = vmatprep.subr.mxu0 0.0
    %702 = vmatpush1.msra.mxu0 0.0
    %703 = vmatprep.subr.mxu0 0.0
    %704 = vmatpush1.msra.mxu0 0.0
    %705 = vmatprep.subr.mxu0 0.0
    %706 = vmatpush1.msra.mxu0 0.0
    %707 = vmatprep.subr.mxu0 0.0
    %708 = vmatpush1.msra.mxu0 0.0
    %709 = vmatprep.mubr.f32.mxu0 0.0
    %710 = vmatmul.mubr.f32.gmra.mrb[0].mxu0 %v643
    %v711 = vpop.f32.mrb[0].mxu0
    %v712 = vadd.f32 0.0, %v711
    %v713 = vpop.f32.mrb[0].mxu0
    %714 = vdwg.mxu0
    %v715 = vmul.f32 %v640, 0.9
    %v716 = vadd.f32 %v715, %v712
    %v717 = vcombine.high %v552, %v552
    %v719 = vadd.f32 %v716, %v717
    %v720 = vtanh.pop %v719
    %v722 = vsel %vm126, %v720, 0
    %724 = vmatprep.subr.mxu0 0.0
    %725 = vmatpush1.msra.mxu0 %v38
    %726 = vmatprep.subr.mxu0 0.0
    %727 = vmatpush1.msra.mxu0 %v39
    %728 = vmatprep.subr.mxu0 0.0
    %729 = vmatpush1.msra.mxu0 %v40
    %730 = vmatprep.subr.mxu0 0.0
    %731 = vmatpush1.msra.mxu0 %v41
    %732 = vmatprep.subr.mxu0 0.0
    %733 = vmatpush1.msra.mxu0 0.0
    %734 = vmatprep.subr.mxu0 0.0
    %735 = vmatpush1.msra.mxu0 0.0
    %736 = vmatprep.subr.mxu0 0.0
    %737 = vmatpush1.msra.mxu0 0.0
    %738 = vmatprep.subr.mxu0 0.0
    %739 = vmatpush1.msra.mxu0 0.0
    %740 = vmatprep.subr.mxu0 0.0
    %741 = vmatpush1.msra.mxu0 0.0
    %742 = vmatprep.subr.mxu0 0.0
    %743 = vmatpush1.msra.mxu0 0.0
    %744 = vmatprep.subr.mxu0 0.0
    %745 = vmatpush1.msra.mxu0 0.0
    %746 = vmatprep.subr.mxu0 0.0
    %747 = vmatpush1.msra.mxu0 0.0
    %748 = vmatprep.subr.mxu0 0.0
    %749 = vmatpush1.msra.mxu0 0.0
    %750 = vmatprep.subr.mxu0 0.0
    %751 = vmatpush1.msra.mxu0 0.0
    %752 = vmatprep.subr.mxu0 0.0
    %753 = vmatpush1.msra.mxu0 0.0
    %754 = vmatprep.subr.mxu0 0.0
    %755 = vmatpush1.msra.mxu0 0.0
    %756 = vmatprep.subr.mxu0 0.0
    %757 = vmatpush1.msra.mxu0 0.0
    %758 = vmatprep.subr.mxu0 0.0
    %759 = vmatpush1.msra.mxu0 0.0
    %760 = vmatprep.subr.mxu0 0.0
    %761 = vmatpush1.msra.mxu0 0.0
    %762 = vmatprep.subr.mxu0 0.0
    %763 = vmatpush1.msra.mxu0 0.0
    %764 = vmatprep.subr.mxu0 0.0
    %765 = vmatpush1.msra.mxu0 0.0
    %766 = vmatprep.subr.mxu0 0.0
    %767 = vmatpush1.msra.mxu0 0.0
    %768 = vmatprep.subr.mxu0 0.0
    %769 = vmatpush1.msra.mxu0 0.0
    %770 = vmatprep.subr.mxu0 0.0
    %771 = vmatpush1.msra.mxu0 0.0
    %772 = vmatprep.subr.mxu0 0.0
    %773 = vmatpush1.msra.mxu0 0.0
    %774 = vmatprep.subr.mxu0 0.0
    %775 = vmatpush1.msra.mxu0 0.0
    %776 = vmatprep.subr.mxu0 0.0
    %777 = vmatpush1.msra.mxu0 0.0
    %778 = vmatprep.subr.mxu0 0.0
    %779 = vmatpush1.msra.mxu0 0.0
    %780 = vmatprep.subr.mxu0 0.0
    %781 = vmatpush1.msra.mxu0 0.0
    %782 = vmatprep.subr.mxu0 0.0
    %783 = vmatpush1.msra.mxu0 0.0
    %784 = vmatprep.subr.mxu0 0.0
    %785 = vmatpush1.msra.mxu0 0.0
    %786 = vmatprep.subr.mxu0 0.0
    %787 = vmatpush1.msra.mxu0 0.0
    %788 = vmatprep.mubr.f32.mxu0 0.0
    %789 = vmatmul.mubr.f32.gmra.mrb[0].mxu0 %v722
    %v790 = vpop.f32.mrb[0].mxu0
    %v791 = vadd.f32 0.0, %v790
    %v792 = vpop.f32.mrb[0].mxu0
    %793 = vdwg.mxu0
    %v794 = vmul.f32 %v719, 0.9
    %v795 = vadd.f32 %v794, %v791
    %v796 = vcombine.high %v638, %v638
    %v798 = vadd.f32 %v795, %v796
    %v799 = vtanh.pop %v798
    %v800 = vlaneseq
    %v801 = vshrl.u32 %v800, 7
    %v802 = vsub.s32 0, %v801
    %v803 = vrot.slane %v304, %v802
    %v805 = vlaneseq
    %v806 = vshrl.u32 %v805, 7
    %v807 = vsub.s32 0, %v806
    %v808 = vrot.slane %v383, %v807
    %v810 = vlaneseq
    %v811 = vshrl.u32 %v810, 7
    %v812 = vsub.s32 0, %v811
    %v813 = vrot.slane %v462, %v812
    %v815 = vlaneseq
    %v816 = vshrl.u32 %v815, 7
    %v817 = vsub.s32 0, %v816
    %v818 = vrot.slane %v555, %v817
    %v820 = vlaneseq
    %v821 = vshrl.u32 %v820, 7
    %v822 = vsub.s32 0, %v821
    %v823 = vrot.slane %v641, %v822
    %v825 = vlaneseq
    %v826 = vshrl.u32 %v825, 7
    %v827 = vsub.s32 0, %v826
    %v828 = vrot.slane %v720, %v827
    %v831 = vlaneseq
    %v832 = vshrl.u32 %v831, 7
    %v833 = vsub.s32 0, %v832
    %v834 = vrot.slane %v799, %v833
    %vm836 = vcmask 1040384
    %v837 = vsel %vm836, %v203, %v803
    %vm838 = vcmask 1041408
    %v839 = vsel %vm838, %v837, %v808
    %vm840 = vcmask 1042432
    %v841 = vsel %vm840, %v839, %v813
    %v842 = vsel %vm49, %v841, %v818
    %vm843 = vcmask 1044480
    %v844 = vsel %vm843, %v842, %v823
    %vm845 = vcmask 1045504
    %v846 = vsel %vm845, %v844, %v828
    %vm847 = vcmask 1046528
    %v848 = vsel %vm847, %v846, %v834
    %849 = vst.msk [vmem:[#allocation3 + $0x1] sm:$0xff] %vm126, %v848
    %v850 = vld [vmem:[%s5] sm:$0xff]
    %v851 = vld [vmem:[%s5 + $0x8] sm:$0xff]
    %v852 = vld [vmem:[%s5 + $0x10] sm:$0xff]
    %v853 = vld [vmem:[%s5 + $0x18] sm:$0xff]
    %v855 = vsel %vm126, %v848, 0
    %857 = vmatprep.subr.mxu0 0.0
    %858 = vmatpush1.msra.mxu0 %v850
    %859 = vmatprep.subr.mxu0 0.0
    %860 = vmatpush1.msra.mxu0 %v851
    %861 = vmatprep.subr.mxu0 0.0
    %862 = vmatpush1.msra.mxu0 %v852
    %863 = vmatprep.subr.mxu0 0.0
    %864 = vmatpush1.msra.mxu0 %v853
    %865 = vmatprep.subr.mxu0 0.0
    %866 = vmatpush1.msra.mxu0 0.0
    %867 = vmatprep.subr.mxu0 0.0
    %868 = vmatpush1.msra.mxu0 0.0
    %869 = vmatprep.subr.mxu0 0.0
    %870 = vmatpush1.msra.mxu0 0.0
    %871 = vmatprep.subr.mxu0 0.0
    %872 = vmatpush1.msra.mxu0 0.0
    %873 = vmatprep.subr.mxu0 0.0
    %874 = vmatpush1.msra.mxu0 0.0
    %875 = vmatprep.subr.mxu0 0.0
    %876 = vmatpush1.msra.mxu0 0.0
    %877 = vmatprep.subr.mxu0 0.0
    %878 = vmatpush1.msra.mxu0 0.0
    %879 = vmatprep.subr.mxu0 0.0
    %880 = vmatpush1.msra.mxu0 0.0
    %881 = vmatprep.subr.mxu0 0.0
    %882 = vmatpush1.msra.mxu0 0.0
    %883 = vmatprep.subr.mxu0 0.0
    %884 = vmatpush1.msra.mxu0 0.0
    %885 = vmatprep.subr.mxu0 0.0
    %886 = vmatpush1.msra.mxu0 0.0
    %887 = vmatprep.subr.mxu0 0.0
    %888 = vmatpush1.msra.mxu0 0.0
    %889 = vmatprep.subr.mxu0 0.0
    %890 = vmatpush1.msra.mxu0 0.0
    %891 = vmatprep.subr.mxu0 0.0
    %892 = vmatpush1.msra.mxu0 0.0
    %893 = vmatprep.subr.mxu0 0.0
    %894 = vmatpush1.msra.mxu0 0.0
    %895 = vmatprep.subr.mxu0 0.0
    %896 = vmatpush1.msra.mxu0 0.0
    %897 = vmatprep.subr.mxu0 0.0
    %898 = vmatpush1.msra.mxu0 0.0
    %899 = vmatprep.subr.mxu0 0.0
    %900 = vmatpush1.msra.mxu0 0.0
    %901 = vmatprep.subr.mxu0 0.0
    %902 = vmatpush1.msra.mxu0 0.0
    %903 = vmatprep.subr.mxu0 0.0
    %904 = vmatpush1.msra.mxu0 0.0
    %905 = vmatprep.subr.mxu0 0.0
    %906 = vmatpush1.msra.mxu0 0.0
    %907 = vmatprep.subr.mxu0 0.0
    %908 = vmatpush1.msra.mxu0 0.0
    %909 = vmatprep.subr.mxu0 0.0
    %910 = vmatpush1.msra.mxu0 0.0
    %911 = vmatprep.subr.mxu0 0.0
    %912 = vmatpush1.msra.mxu0 0.0
    %913 = vmatprep.subr.mxu0 0.0
    %914 = vmatpush1.msra.mxu0 0.0
    %915 = vmatprep.subr.mxu0 0.0
    %916 = vmatpush1.msra.mxu0 0.0
    %917 = vmatprep.subr.mxu0 0.0
    %918 = vmatpush1.msra.mxu0 0.0
    %919 = vmatprep.subr.mxu0 0.0
    %920 = vmatpush1.msra.mxu0 0.0
    %921 = vmatprep.mubr.f32.mxu0 0.0
    %922 = vmatmul.mubr.f32.gmra.mrb[0].mxu0 %v855
    %v923 = vpop.f32.mrb[0].mxu0
    %v924 = vadd.f32 0.0, %v923
    %v925 = vpop.f32.mrb[0].mxu0
    %926 = vdwg.mxu0
    %vm927 = vcmask 15360
    %928 = vst.msk [vmem:[%s7] sm:$0xff] %vm927, %v924
    // Predicated region
    $region26: #{rnn_forward.1} parent=1 // pred_check
      _
    $region27: #{rnn_forward.1} parent=1 // pred_check_branch
      %930 = sbr.rel (0) target = $region29
    $region28: #{rnn_forward.1} parent=1 // pred_region
      %s932 = ssub.s32 256, 256
      %933 = vsyncadd [#allocation4], %s932
      %s934 = sshll.u32 [#allocation3], 4
      %s935 = int_to_ptr.vmem [resolvable:$true] %s934
      %940 = dma.vmem_to_hbm [thread:$0]  %s935, 256, %s6, [#allocation4], 128, 128, 8
    $region29: #{rnn_forward.1} parent=1 // pred_fallthru
      _
    // Predicated region
    $region30: #{rnn_forward.1} parent=1 // pred_check
      _
    $region31: #{rnn_forward.1} parent=1 // pred_check_branch
      %942 = sbr.rel (0) target = $region33
    $region32: #{rnn_forward.1} parent=1 // pred_region
      _
    $region33: #{rnn_forward.1} parent=1 // pred_fallthru
      _
    // Predicated region
    $region34: #{rnn_forward.1} parent=1 // pred_check
      _
    $region35: #{rnn_forward.1} parent=1 // pred_check_branch
      %944 = sbr.rel (0) target = $region37
    $region36: #{rnn_forward.1} parent=1 // pred_region
      %945 = dma.done [#allocation4], 256
    $region37: #{rnn_forward.1} parent=1 // pred_fallthru
      _
    // Predicated region
    $region38: #{rnn_forward.1} parent=1 // pred_check
      _
    $region39: #{rnn_forward.1} parent=1 // pred_check_branch
      %947 = sbr.rel (0) target = $region41
    $region40: #{rnn_forward.1} parent=1 // pred_region
      _
    $region41: #{rnn_forward.1} parent=1 // pred_fallthru
      _
    %948 = vsyncpa [#allocation4], 1

</llo_original>
